<compile_context>
chip_gen: v7x
topology: tpu7x:2x2x1
jax: 0.10.0
libtpu: 0.0.40
codegen_flags: <defaults>
</compile_context>

<pallas_src>
import functools

import numpy as np
import jax
import jax.numpy as jnp
from jax.experimental import pallas as pl
from jax.experimental.pallas import tpu as pltpu


# ------------------------------- helpers --------------------------------------

def _round_up(x, m):
    return ((x + m - 1) // m) * m


def _pad_to(a, shape):
    """Zero-pad array `a` up to `shape` (same rank)."""
    pads = [(0, t - s) for s, t in zip(a.shape, shape)]
    return jnp.pad(a, pads)


def _choose_batch_tiling(B, sublane=8, tile_max=512):
    """Return (B_pad, batch_tile) with batch_tile dividing B_pad.

    - B <= tile_max: no batch padding at all (full-dim blocks are legal); split
      into 2 tiles when that costs nothing so a v7x megacore can use both TCs.
    - B > tile_max: pad only to a sublane multiple and pick the largest
      multiple-of-8 divisor <= tile_max; only if the divisor structure is
      pathological fall back to padding up to a full tile.
    """
    if B <= tile_max:
        if B >= 2 * sublane and B % (2 * sublane) == 0:
            return B, B // 2          # >=2 grid steps, still 8-row aligned, no padding
        return B, B                   # one full-batch block (block dim == full dim)
    B_pad = _round_up(B, sublane)
    best = sublane
    t = sublane
    while t <= tile_max:
        if B_pad % t == 0:
            best = t
        t += sublane
    if best < 128:                    # pathological divisors -> accept a little padding
        B_pad = _round_up(B, tile_max)
        best = tile_max
    return B_pad, best


# ----------------------------- Pallas kernel ----------------------------------

def fused_made_kernel(x_ref, *refs, out_widths):
    """Fused MADE forward: x -> [matmul + bias (+ReLU)] * L -> out, all in VMEM.

    refs layout: (w_0, ..., w_{L-1}, bias_stack, out)
      x_ref      : (TB, F0)           (F0 = inp_dim*d, unpadded)
      w_i        : (Fi, F{i+1}_pad)   mask already folded in, pre-transposed
      bias_stack : (L, max_pad)       f32, one row per layer
    """
    o_ref, b_ref = refs[-1], refs[-2]
    w_refs = refs[:-2]
    n_layers = len(w_refs)

    h = x_ref[...].astype(jnp.float32)
    for i, w_ref in enumerate(w_refs):
        w = w_ref[...]
        # Only the matmul LHS is downcast when weights are bf16; bias/ReLU stay f32.
        lhs = h.astype(w.dtype) if w.dtype != h.dtype else h
        h = jnp.dot(lhs, w, preferred_element_type=jnp.float32)
        h = h + b_ref[i:i + 1, :out_widths[i]]
        if i < n_layers - 1:          # ReLU on all hidden layers
            h = jnp.maximum(h, 0.0)
    o_ref[...] = h.astype(o_ref.dtype)


def fused_made_forward(x, weights, bias_stack, batch_tile, single_buffer_weights=True):
    """x: (B_pad, F0); weights: [(F0, P1), (P1, P2), ...]; bias_stack: (L, max_pad)."""
    B_pad, in_w = x.shape
    out_pad = weights[-1].shape[1]
    out_widths = tuple(int(w.shape[1]) for w in weights)
    grid = (B_pad // batch_tile,)

    # Grid-stationary operands (index_map is constant) -> request single buffering.
    stat_kwargs = dict(pipeline_mode=pl.Buffered(1)) if single_buffer_weights else {}

    in_specs = [pl.BlockSpec((batch_tile, in_w), lambda i: (i, 0))]
    for w in weights:
        in_specs.append(pl.BlockSpec(w.shape, lambda i: (0, 0), **stat_kwargs))
    in_specs.append(pl.BlockSpec(bias_stack.shape, lambda i: (0, 0), **stat_kwargs))

    out_specs = pl.BlockSpec((batch_tile, out_pad), lambda i: (i, 0))

    # Explicit VMEM budget: stationary weights ~single-buffered, activation tiles
    # double-buffered, plus headroom for live intermediates.  Capped at 64 MiB
    # (the smallest physical VMEM across v5e/v6e/v7x).
    vmem_bytes = (sum(int(w.size) * w.dtype.itemsize for w in weights)
                  + int(bias_stack.size) * 4
                  + 2 * batch_tile * in_w * 4
                  + 2 * batch_tile * out_pad * 4
                  + 8 * batch_tile * max(out_widths) * 4)
    vmem_limit = int(min(64 << 20, max(16 << 20, 2 * vmem_bytes)))

    return pl.pallas_call(
        functools.partial(fused_made_kernel, out_widths=out_widths),
        out_shape=jax.ShapeDtypeStruct((B_pad, out_pad), jnp.float32),
        grid=grid,
        in_specs=in_specs,
        out_specs=out_specs,
        compiler_params=pltpu.CompilerParams(
            dimension_semantics=("parallel",),
            vmem_limit_bytes=vmem_limit),
    )(x, *weights, bias_stack)


# ----------------------------- MADE model glue ---------------------------------

class MadePallas:
    """JAX/Pallas re-implementation of the MADE forward pass (single fused kernel)."""

    LANE = 128           # lane tile (last dim)
    SUBLANE = 8          # f32 sublane tile
    BATCH_TILE_MAX = 512

    def __init__(self, hidden_sizes, inp_dim, out_dim, d, key, use_bf16_weights=False):
        assert out_dim == inp_dim, "MADE's mask construction requires out_dim == inp_dim"
        self.hidden_sizes = list(hidden_sizes)
        self.inp_dim = inp_dim
        self.out_dim = out_dim
        self.d = d

        sizes = [inp_dim * d] + self.hidden_sizes + [out_dim * d]
        self.sizes = sizes
        self.n_layers = len(sizes) - 1

        # --- deterministic parameter init (mimics nn.Linear default bounds) ---
        self.weights = []   # torch layout (out_f, in_f), kept for the JAX reference
        self.biases = []
        for s_in, s_out in zip(sizes[:-1], sizes[1:]):
            key, kw, kb = jax.random.split(key, 3)
            bound = 1.0 / np.sqrt(s_in)
            w = jax.random.uniform(kw, (s_out, s_in), jnp.float32, -bound, bound)
            b = jax.random.uniform(kb, (s_out,), jnp.float32, -bound, bound)
            self.weights.append(w)
            self.biases.append(b)

        # --- deterministic MADE masks (same recipe as the torch module) ---
        rng = np.random.RandomState(0)
        L = len(self.hidden_sizes)
        m = {}
        m[-1] = np.repeat(np.arange(self.inp_dim), self.d)
        for l in range(L):
            m[l] = rng.randint(m[l - 1].min(), self.inp_dim - 1,
                               size=self.hidden_sizes[l])
        masks = [m[l - 1][:, None] <= m[l][None, :] for l in range(L)]
        masks.append(m[L - 1][:, None] < m[-1][None, :])
        # masks are already (in_f, out_f) — exactly the kernel layout
        self.masks = [jnp.asarray(mk.astype(np.float32)) for mk in masks]

        # --- kernel-layout params: mask folded in, transposed, padded ---
        # Layer-0 input width stays at its natural size (no 128-lane HBM padding);
        # every layer OUTPUT width pads to 128 lanes (lane-dense matmuls & stores).
        out_pads = [_round_up(s, self.LANE) for s in sizes[1:]]
        in_pads = [sizes[0]] + out_pads[:-1]
        self.out_pads = out_pads
        self.out_pad = out_pads[-1]

        wdtype = jnp.bfloat16 if use_bf16_weights else jnp.float32
        self.kernel_weights = []
        for w, b, mk, pin, pout in zip(self.weights, self.biases, self.masks,
                                       in_pads, out_pads):
            w_masked_t = jnp.transpose(w) * mk              # (in_f, out_f), masked once
            self.kernel_weights.append(_pad_to(w_masked_t, (pin, pout)).astype(wdtype))

        # one consolidated bias operand (L, max_pad), f32
        max_pad = max(out_pads)
        bias_stack = jnp.zeros((self.n_layers, max_pad), jnp.float32)
        for i, b in enumerate(self.biases):
            bias_stack = bias_stack.at[i, :b.shape[0]].set(b)
        self.bias_stack = bias_stack

        self._single_buffer = True
        self._fwd = jax.jit(functools.partial(self._forward_impl,
                                              single_buffer_weights=True))

    # jitted padded forward: (pad batch if needed) -> fused kernel -> slice -> reshape
    def _forward_impl(self, X, single_buffer_weights):
        B = X.shape[0]
        B_pad, batch_tile = _choose_batch_tiling(B, self.SUBLANE, self.BATCH_TILE_MAX)
        x = X if B_pad == B else jnp.pad(X, ((0, B_pad - B), (0, 0)))
        out = fused_made_forward(x, self.kernel_weights, self.bias_stack,
                                 batch_tile, single_buffer_weights)
        out = out[:B, :self.out_dim * self.d]
        return out.reshape(-1, self.inp_dim, self.d)

    def forward(self, X):
        # X: (B, inp_dim * d) float32
        try:
            return self._fwd(X)
        except Exception:
            if self._single_buffer:
                # Fallback if this jax build rejects pl.Buffered(1) on stationary inputs.
                self._single_buffer = False
                self._fwd = jax.jit(functools.partial(self._forward_impl,
                                                      single_buffer_weights=False))
                return self._fwd(X)
            raise

    def forward_ref(self, X):
        # pure-JAX f32 reference for correctness checking (unfused, unpadded)
        h = X
        for i, (w, b, mk) in enumerate(zip(self.weights, self.biases, self.masks)):
            h = h @ (jnp.transpose(w) * mk) + b
            if i < self.n_layers - 1:
                h = jnp.maximum(h, 0.0)
        return h.reshape(-1, self.inp_dim, self.d)


# ----------------------------------- main --------------------------------------

if __name__ == "__main__":
    key = jax.random.PRNGKey(0)

    inp_dim = 8     # number of autoregressive variables
    d = 4           # one-hot / categorical dimension per variable
    out_dim = 8     # must equal inp_dim (see mask construction)
    hidden_sizes = [32, 32]

    key, kmodel, kx, kx2 = jax.random.split(key, 4)
    model = MadePallas(hidden_sizes, inp_dim, out_dim, d, kmodel)

    # 1) tiny batch -> single full-batch block, no padding of X at all
    X = jax.random.uniform(kx, (2, inp_dim * d), jnp.float32)
    out = jax.block_until_ready(model.forward(X))
    assert out.shape == (2, inp_dim, d), out.shape
    ref = model.forward_ref(X)
    np.testing.assert_allclose(np.asarray(out), np.asarray(ref), rtol=1e-5, atol=1e-5)

    # 2) batch that exercises the multi-tile (2 grid steps) path
    X2 = jax.random.uniform(kx2, (48, inp_dim * d), jnp.float32)
    out2 = jax.block_until_ready(model.forward(X2))
    ref2 = model.forward_ref(X2)
    np.testing.assert_allclose(np.asarray(out2), np.asarray(ref2), rtol=1e-5, atol=1e-5)

    # 3) opt-in bf16-weight fast path (v6e/v7x MXU rate); looser tolerance by design
    model_bf16 = MadePallas(hidden_sizes, inp_dim, out_dim, d, kmodel,
                            use_bf16_weights=True)
    out_bf16 = jax.block_until_ready(model_bf16.forward(X2))
    np.testing.assert_allclose(np.asarray(out_bf16), np.asarray(ref2),
                               rtol=3e-2, atol=3e-2)

    print("KERNEL_OK")
</pallas_src>

<mosaic_0001>
module attributes {stable_mosaic.version = 11 : i64} {
  func.func @fused_made_kernel(%arg0: i32, %arg1: memref<2x32xf32, #tpu.memory_space<vmem>>, %arg2: memref<32x128xf32, #tpu.memory_space<vmem>>, %arg3: memref<128x128xf32, #tpu.memory_space<vmem>>, %arg4: memref<128x128xf32, #tpu.memory_space<vmem>>, %arg5: memref<3x128xf32, #tpu.memory_space<vmem>>, %arg6: memref<2x128xf32, #tpu.memory_space<vmem>>) attributes {dimension_semantics = [#tpu.dimension_semantics<parallel>], iteration_bounds = array<i64: 1>, scalar_prefetch = 0 : i64, scratch_operands = 0 : i64, tpu.core_type = #tpu.core_type<tc>, window_params = [{transform_indices = @transform_0, window_bounds = array<i64: 2, 32>}, {pipeline_mode = #tpu.pipeline_mode<synchronous>, transform_indices = @transform_1, window_bounds = array<i64: 32, 128>}, {pipeline_mode = #tpu.pipeline_mode<synchronous>, transform_indices = @transform_2, window_bounds = array<i64: 128, 128>}, {pipeline_mode = #tpu.pipeline_mode<synchronous>, transform_indices = @transform_3, window_bounds = array<i64: 128, 128>}, {pipeline_mode = #tpu.pipeline_mode<synchronous>, transform_indices = @transform_4, window_bounds = array<i64: 3, 128>}, {transform_indices = @transform_5, window_bounds = array<i64: 2, 128>}]} {
    %c0 = arith.constant 0 : index
    %c0_0 = arith.constant 0 : index
    %0 = vector.load %arg1[%c0, %c0_0] : memref<2x32xf32, #tpu.memory_space<vmem>>, vector<2x32xf32>
    %c0_1 = arith.constant 0 : index
    %c0_2 = arith.constant 0 : index
    %1 = vector.load %arg2[%c0_1, %c0_2] : memref<32x128xf32, #tpu.memory_space<vmem>>, vector<32x128xf32>
    %cst = arith.constant dense<0.000000e+00> : vector<2x128xf32>
    %2 = tpu.matmul %0, %1, %cst {dimension_numbers = #tpu.dot_dimension_numbers<[1], [0], [0], [1], [0, 0, 1, 1], [], []>} : vector<2x32xf32>, vector<32x128xf32>, vector<2x128xf32> -> vector<2x128xf32>
    %c0_3 = arith.constant 0 : index
    %c0_4 = arith.constant 0 : index
    %3 = vector.load %arg5[%c0_3, %c0_4] : memref<3x128xf32, #tpu.memory_space<vmem>>, vector<1x128xf32>
    %4 = vector.broadcast %3 : vector<1x128xf32> to vector<2x128xf32>
    %5 = arith.addf %2, %4 : vector<2x128xf32>
    %cst_5 = arith.constant 0.000000e+00 : f32
    %6 = vector.broadcast %cst_5 : f32 to vector<2x128xf32>
    %7 = arith.maximumf %5, %6 : vector<2x128xf32>
    %c0_6 = arith.constant 0 : index
    %c0_7 = arith.constant 0 : index
    %8 = vector.load %arg3[%c0_6, %c0_7] : memref<128x128xf32, #tpu.memory_space<vmem>>, vector<128x128xf32>
    %cst_8 = arith.constant dense<0.000000e+00> : vector<2x128xf32>
    %9 = tpu.matmul %7, %8, %cst_8 {dimension_numbers = #tpu.dot_dimension_numbers<[1], [0], [0], [1], [0, 0, 1, 1], [], []>} : vector<2x128xf32>, vector<128x128xf32>, vector<2x128xf32> -> vector<2x128xf32>
    %c1 = arith.constant 1 : index
    %c0_9 = arith.constant 0 : index
    %10 = vector.load %arg5[%c1, %c0_9] : memref<3x128xf32, #tpu.memory_space<vmem>>, vector<1x128xf32>
    %11 = vector.broadcast %10 : vector<1x128xf32> to vector<2x128xf32>
    %12 = arith.addf %9, %11 : vector<2x128xf32>
    %cst_10 = arith.constant 0.000000e+00 : f32
    %13 = vector.broadcast %cst_10 : f32 to vector<2x128xf32>
    %14 = arith.maximumf %12, %13 : vector<2x128xf32>
    %c0_11 = arith.constant 0 : index
    %c0_12 = arith.constant 0 : index
    %15 = vector.load %arg4[%c0_11, %c0_12] : memref<128x128xf32, #tpu.memory_space<vmem>>, vector<128x128xf32>
    %cst_13 = arith.constant dense<0.000000e+00> : vector<2x128xf32>
    %16 = tpu.matmul %14, %15, %cst_13 {dimension_numbers = #tpu.dot_dimension_numbers<[1], [0], [0], [1], [0, 0, 1, 1], [], []>} : vector<2x128xf32>, vector<128x128xf32>, vector<2x128xf32> -> vector<2x128xf32>
    %c2 = arith.constant 2 : index
    %c0_14 = arith.constant 0 : index
    %17 = vector.load %arg5[%c2, %c0_14] : memref<3x128xf32, #tpu.memory_space<vmem>>, vector<1x128xf32>
    %18 = vector.broadcast %17 : vector<1x128xf32> to vector<2x128xf32>
    %19 = arith.addf %16, %18 : vector<2x128xf32>
    %c0_15 = arith.constant 0 : index
    %c0_16 = arith.constant 0 : index
    %20 = vector.load %arg6[%c0_15, %c0_16] : memref<2x128xf32, #tpu.memory_space<vmem>>, vector<2x128xf32>
    tpu.vector_store %arg6[%c0_15, %c0_16], %19 {strides = array<i32>} : memref<2x128xf32, #tpu.memory_space<vmem>>, vector<2x128xf32>,
    return
  }
  func.func @transform_0(%arg0: i32) -> (i32, i32) {
    %c0_i32 = arith.constant 0 : i32
    %c0_i32_0 = arith.constant 0 : i32
    return %arg0, %c0_i32 : i32, i32
  }
  func.func @transform_1(%arg0: i32) -> (i32, i32) {
    %c0_i32 = arith.constant 0 : i32
    %c0_i32_0 = arith.constant 0 : i32
    %c0_i32_1 = arith.constant 0 : i32
    return %c0_i32, %c0_i32_0 : i32, i32
  }
  func.func @transform_2(%arg0: i32) -> (i32, i32) {
    %c0_i32 = arith.constant 0 : i32
    %c0_i32_0 = arith.constant 0 : i32
    %c0_i32_1 = arith.constant 0 : i32
    return %c0_i32, %c0_i32_0 : i32, i32
  }
  func.func @transform_3(%arg0: i32) -> (i32, i32) {
    %c0_i32 = arith.constant 0 : i32
    %c0_i32_0 = arith.constant 0 : i32
    %c0_i32_1 = arith.constant 0 : i32
    return %c0_i32, %c0_i32_0 : i32, i32
  }
  func.func @transform_4(%arg0: i32) -> (i32, i32) {
    %c0_i32 = arith.constant 0 : i32
    %c0_i32_0 = arith.constant 0 : i32
    %c0_i32_1 = arith.constant 0 : i32
    return %c0_i32, %c0_i32_0 : i32, i32
  }
  func.func @transform_5(%arg0: i32) -> (i32, i32) {
    %c0_i32 = arith.constant 0 : i32
    %c0_i32_0 = arith.constant 0 : i32
    return %arg0, %c0_i32 : i32, i32
  }
}

module attributes {stable_mosaic.version = 11 : i64} {
  func.func @fused_made_kernel(%arg0: i32, %arg1: memref<2x32xf32, #tpu.memory_space<vmem>>, %arg2: memref<32x128xf32, #tpu.memory_space<vmem>>, %arg3: memref<128x128xf32, #tpu.memory_space<vmem>>, %arg4: memref<128x128xf32, #tpu.memory_space<vmem>>, %arg5: memref<3x128xf32, #tpu.memory_space<vmem>>, %arg6: memref<2x128xf32, #tpu.memory_space<vmem>>) attributes {dimension_semantics = [#tpu.dimension_semantics<parallel>], iteration_bounds = array<i64: 1>, scalar_prefetch = 0 : i64, scratch_operands = 0 : i64, tpu.core_type = #tpu.core_type<tc>, window_params = [{transform_indices = @transform_0, window_bounds = array<i64: 2, 32>}, {pipeline_mode = #tpu.pipeline_mode<synchronous>, transform_indices = @transform_1, window_bounds = array<i64: 32, 128>}, {pipeline_mode = #tpu.pipeline_mode<synchronous>, transform_indices = @transform_2, window_bounds = array<i64: 128, 128>}, {pipeline_mode = #tpu.pipeline_mode<synchronous>, transform_indices = @transform_3, window_bounds = array<i64: 128, 128>}, {pipeline_mode = #tpu.pipeline_mode<synchronous>, transform_indices = @transform_4, window_bounds = array<i64: 3, 128>}, {transform_indices = @transform_5, window_bounds = array<i64: 2, 128>}]} {
    %c0 = arith.constant 0 : index
    %c0_0 = arith.constant 0 : index
    %0 = vector.load %arg1[%c0, %c0_0] : memref<2x32xf32, #tpu.memory_space<vmem>>, vector<2x32xf32>
    %c0_1 = arith.constant 0 : index
    %c0_2 = arith.constant 0 : index
    %1 = vector.load %arg2[%c0_1, %c0_2] : memref<32x128xf32, #tpu.memory_space<vmem>>, vector<32x128xf32>
    %cst = arith.constant dense<0.000000e+00> : vector<2x128xf32>
    %2 = tpu.matmul %0, %1, %cst {dimension_numbers = #tpu.dot_dimension_numbers<[1], [0], [0], [1], [0, 0, 1, 1], [], []>} : vector<2x32xf32>, vector<32x128xf32>, vector<2x128xf32> -> vector<2x128xf32>
    %c0_3 = arith.constant 0 : index
    %c0_4 = arith.constant 0 : index
    %3 = vector.load %arg5[%c0_3, %c0_4] : memref<3x128xf32, #tpu.memory_space<vmem>>, vector<1x128xf32>
    %4 = vector.broadcast %3 : vector<1x128xf32> to vector<2x128xf32>
    %5 = arith.addf %2, %4 : vector<2x128xf32>
    %cst_5 = arith.constant 0.000000e+00 : f32
    %6 = vector.broadcast %cst_5 : f32 to vector<2x128xf32>
    %7 = arith.maximumf %5, %6 : vector<2x128xf32>
    %c0_6 = arith.constant 0 : index
    %c0_7 = arith.constant 0 : index
    %8 = vector.load %arg3[%c0_6, %c0_7] : memref<128x128xf32, #tpu.memory_space<vmem>>, vector<128x128xf32>
    %cst_8 = arith.constant dense<0.000000e+00> : vector<2x128xf32>
    %9 = tpu.matmul %7, %8, %cst_8 {dimension_numbers = #tpu.dot_dimension_numbers<[1], [0], [0], [1], [0, 0, 1, 1], [], []>} : vector<2x128xf32>, vector<128x128xf32>, vector<2x128xf32> -> vector<2x128xf32>
    %c1 = arith.constant 1 : index
    %c0_9 = arith.constant 0 : index
    %10 = vector.load %arg5[%c1, %c0_9] : memref<3x128xf32, #tpu.memory_space<vmem>>, vector<1x128xf32>
    %11 = vector.broadcast %10 : vector<1x128xf32> to vector<2x128xf32>
    %12 = arith.addf %9, %11 : vector<2x128xf32>
    %cst_10 = arith.constant 0.000000e+00 : f32
    %13 = vector.broadcast %cst_10 : f32 to vector<2x128xf32>
    %14 = arith.maximumf %12, %13 : vector<2x128xf32>
    %c0_11 = arith.constant 0 : index
    %c0_12 = arith.constant 0 : index
    %15 = vector.load %arg4[%c0_11, %c0_12] : memref<128x128xf32, #tpu.memory_space<vmem>>, vector<128x128xf32>
    %cst_13 = arith.constant dense<0.000000e+00> : vector<2x128xf32>
    %16 = tpu.matmul %14, %15, %cst_13 {dimension_numbers = #tpu.dot_dimension_numbers<[1], [0], [0], [1], [0, 0, 1, 1], [], []>} : vector<2x128xf32>, vector<128x128xf32>, vector<2x128xf32> -> vector<2x128xf32>
    %c2 = arith.constant 2 : index
    %c0_14 = arith.constant 0 : index
    %17 = vector.load %arg5[%c2, %c0_14] : memref<3x128xf32, #tpu.memory_space<vmem>>, vector<1x128xf32>
    %18 = vector.broadcast %17 : vector<1x128xf32> to vector<2x128xf32>
    %19 = arith.addf %16, %18 : vector<2x128xf32>
    %c0_15 = arith.constant 0 : index
    %c0_16 = arith.constant 0 : index
    %20 = vector.load %arg6[%c0_15, %c0_16] : memref<2x128xf32, #tpu.memory_space<vmem>>, vector<2x128xf32>
    tpu.vector_store %arg6[%c0_15, %c0_16], %19 {strides = array<i32>} : memref<2x128xf32, #tpu.memory_space<vmem>>, vector<2x128xf32>,
    return
  }
  func.func @transform_0(%arg0: i32) -> (i32, i32) {
    %c0_i32 = arith.constant 0 : i32
    %c0_i32_0 = arith.constant 0 : i32
    return %arg0, %c0_i32 : i32, i32
  }
  func.func @transform_1(%arg0: i32) -> (i32, i32) {
    %c0_i32 = arith.constant 0 : i32
    %c0_i32_0 = arith.constant 0 : i32
    %c0_i32_1 = arith.constant 0 : i32
    return %c0_i32, %c0_i32_0 : i32, i32
  }
  func.func @transform_2(%arg0: i32) -> (i32, i32) {
    %c0_i32 = arith.constant 0 : i32
    %c0_i32_0 = arith.constant 0 : i32
    %c0_i32_1 = arith.constant 0 : i32
    return %c0_i32, %c0_i32_0 : i32, i32
  }
  func.func @transform_3(%arg0: i32) -> (i32, i32) {
    %c0_i32 = arith.constant 0 : i32
    %c0_i32_0 = arith.constant 0 : i32
    %c0_i32_1 = arith.constant 0 : i32
    return %c0_i32, %c0_i32_0 : i32, i32
  }
  func.func @transform_4(%arg0: i32) -> (i32, i32) {
    %c0_i32 = arith.constant 0 : i32
    %c0_i32_0 = arith.constant 0 : i32
    %c0_i32_1 = arith.constant 0 : i32
    return %c0_i32, %c0_i32_0 : i32, i32
  }
  func.func @transform_5(%arg0: i32) -> (i32, i32) {
    %c0_i32 = arith.constant 0 : i32
    %c0_i32_0 = arith.constant 0 : i32
    return %arg0, %c0_i32 : i32, i32
  }
}

</mosaic_0001>

<llo_original>
// kernel: _forward_impl.1
$region0: #{_forward_impl.1}
  #allocation0 [shape = 'u32[]', space=smem, size = 0x4, offset = 0x4, fixed_abs, tag = 'smem constant byte address 0x4 - core index']
  #allocation1 [shape = 'u32[144,128]{1,0:T(1,128)}', space=vmem, size = 0x12000, scoped, tag = 'internal scratch']
  %s0 = inlined_call_operand.hbm [shape: f32[2,32], index: 0, kind: input, shape index: {}]
  %s1 = inlined_call_operand.hbm [shape: f32[32,128], index: 1, kind: input, shape index: {}]
  %s2 = inlined_call_operand.hbm [shape: f32[128,128], index: 2, kind: input, shape index: {}]
  %s3 = inlined_call_operand.hbm [shape: f32[128,128], index: 3, kind: input, shape index: {}]
  %s4 = inlined_call_operand.vmem [shape: f32[3,128], index: 4, kind: input, shape index: {}]
  %s5 = inlined_call_operand.vmem [shape: f32[2,128], index: 5, kind: output, shape index: {}]
  %s6 = sld [smem:[#allocation0]]
  $region46: #{_forward_impl.1} parent=0
    _
  %s8 = ssub.s32 1, %s6
  %s9 = scalar_select 0, %s8, %s6
  $region1: #{_forward_impl.1} parent=0
    #allocation2 [shape = 'u8[1024]{0}', space=vmem, size = 0x400, scoped, tag = 'input window, operand 0, single buffered']
    #allocation3 [shape = 's32[1]{0}', space=sflag, size = 0x4, scoped, tag = 'scoped memory for _forward_impl.1']
    #allocation4 [shape = 'u8[16384]{0}', space=vmem, size = 0x4000, scoped, tag = 'input window, operand 1, single buffered']
    #allocation5 [shape = 's32[1]{0}', space=sflag, size = 0x4, scoped, tag = 'scoped memory for _forward_impl.1']
    #allocation6 [shape = 'u8[65536]{0}', space=vmem, size = 0x10000, scoped, tag = 'input window, operand 2, single buffered']
    #allocation7 [shape = 'u8[65536]{0}', space=vmem, size = 0x10000, scoped, tag = 'input window, operand 3, single buffered']
    #allocation8 [shape = 's32[1]{0}', space=sflag, size = 0x4, scoped, tag = 'scoped memory for _forward_impl.1']
    %10 = vsyncpa [#allocation3], 0
    %11 = vsyncpa [#allocation5], 0
    %12 = vsyncpa [#allocation8], 0
    // Predicated region
    $region2: #{_forward_impl.1} parent=1 // pred_check
      _
    $region3: #{_forward_impl.1} parent=1 // pred_check_branch
      %14 = sbr.rel (0) target = $region5
    $region4: #{_forward_impl.1} parent=1 // pred_region
      %s16 = ssub.s32 32, 32
      %17 = vsyncadd [#allocation3], %s16
      %s19 = sshll.u32 [#allocation2], 4
      %s20 = int_to_ptr.vmem [resolvable:$true] %s19
      %22 = dma.hbm_to_vmem [thread:$0]  %s0, 32, %s20, [#allocation3]
    $region5: #{_forward_impl.1} parent=1 // pred_fallthru
      _
    // Predicated region
    $region6: #{_forward_impl.1} parent=1 // pred_check
      _
    $region7: #{_forward_impl.1} parent=1 // pred_check_branch
      %24 = sbr.rel (0) target = $region9
    $region8: #{_forward_impl.1} parent=1 // pred_region
      %s26 = ssub.s32 512, 512
      %27 = vsyncadd [#allocation5], %s26
      %s28 = sshll.u32 [#allocation4], 4
      %s29 = int_to_ptr.vmem [resolvable:$true] %s28
      %34 = dma.hbm_to_vmem [thread:$0]  %s1, 512, %s29, [#allocation5], 128, 128, 8
    $region9: #{_forward_impl.1} parent=1 // pred_fallthru
      _
    // Predicated region
    $region10: #{_forward_impl.1} parent=1 // pred_check
      _
    $region11: #{_forward_impl.1} parent=1 // pred_check_branch
      %36 = sbr.rel (0) target = $region13
    $region12: #{_forward_impl.1} parent=1 // pred_region
      %s38 = ssub.s32 2048, 2048
      %39 = vsyncadd [#allocation5], %s38
      %s40 = sshll.u32 [#allocation6], 4
      %s41 = int_to_ptr.vmem [resolvable:$true] %s40
      %46 = dma.hbm_to_vmem [thread:$0]  %s2, 2048, %s41, [#allocation5], 128, 128, 8
    $region13: #{_forward_impl.1} parent=1 // pred_fallthru
      _
    // Predicated region
    $region14: #{_forward_impl.1} parent=1 // pred_check
      _
    $region15: #{_forward_impl.1} parent=1 // pred_check_branch
      %48 = sbr.rel (0) target = $region17
    $region16: #{_forward_impl.1} parent=1 // pred_region
      %s50 = ssub.s32 2048, 2048
      %51 = vsyncadd [#allocation8], %s50
      %s52 = sshll.u32 [#allocation7], 4
      %s53 = int_to_ptr.vmem [resolvable:$true] %s52
      %58 = dma.hbm_to_vmem [thread:$0]  %s3, 2048, %s53, [#allocation8], 128, 128, 8
    $region17: #{_forward_impl.1} parent=1 // pred_fallthru
      _
    // Predicated region
    $region18: #{_forward_impl.1} parent=1 // pred_check
      _
    $region19: #{_forward_impl.1} parent=1 // pred_check_branch
      %60 = sbr.rel (0) target = $region21
    $region20: #{_forward_impl.1} parent=1 // pred_region
      _
    $region21: #{_forward_impl.1} parent=1 // pred_fallthru
      _
    // Predicated region
    $region22: #{_forward_impl.1} parent=1 // pred_check
      _
    $region23: #{_forward_impl.1} parent=1 // pred_check_branch
      %62 = sbr.rel (0) target = $region25
    $region24: #{_forward_impl.1} parent=1 // pred_region
      %63 = dma.done [#allocation3], 32
    $region25: #{_forward_impl.1} parent=1 // pred_fallthru
      _
    // Predicated region
    $region26: #{_forward_impl.1} parent=1 // pred_check
      _
    $region27: #{_forward_impl.1} parent=1 // pred_check_branch
      %65 = sbr.rel (0) target = $region29
    $region28: #{_forward_impl.1} parent=1 // pred_region
      %66 = dma.done [#allocation5], 512
    $region29: #{_forward_impl.1} parent=1 // pred_fallthru
      _
    // Predicated region
    $region30: #{_forward_impl.1} parent=1 // pred_check
      _
    $region31: #{_forward_impl.1} parent=1 // pred_check_branch
      %68 = sbr.rel (0) target = $region33
    $region32: #{_forward_impl.1} parent=1 // pred_region
      %69 = dma.done [#allocation5], 2048
    $region33: #{_forward_impl.1} parent=1 // pred_fallthru
      _
    // Predicated region
    $region34: #{_forward_impl.1} parent=1 // pred_check
      _
    $region35: #{_forward_impl.1} parent=1 // pred_check_branch
      %71 = sbr.rel (0) target = $region37
    $region36: #{_forward_impl.1} parent=1 // pred_region
      %72 = dma.done [#allocation8], 2048
    $region37: #{_forward_impl.1} parent=1 // pred_fallthru
      _
    %v73 = vld [vmem:[#allocation2] sm:$0x3]
    %v74 = vld [vmem:[#allocation4] sm:$0xff]
    %v75 = vld [vmem:[#allocation4 + $0x8] sm:$0xff]
    %v76 = vld [vmem:[#allocation4 + $0x10] sm:$0xff]
    %v77 = vld [vmem:[#allocation4 + $0x18] sm:$0xff]
    %v78 = vld [vmem:[%s4] sm:$0x1]
    %v79 = vlaneseq
    %v80 = vshrl.u32 %v79, 7
    %v81 = vsub.s32 0, %v80
    %v82 = vrot.slane %v78, %v81
    %vm83 = vcmask 261120
    %v85 = vsel %vm83, %v73, 0
    %87 = vmatprep.subr.mxu0 0.0
    %88 = vmatpush1.msra.mxu0 %v74
    %89 = vmatprep.subr.mxu0 0.0
    %90 = vmatpush1.msra.mxu0 %v75
    %91 = vmatprep.subr.mxu0 0.0
    %92 = vmatpush1.msra.mxu0 %v76
    %93 = vmatprep.subr.mxu0 0.0
    %94 = vmatpush1.msra.mxu0 %v77
    %95 = vmatprep.subr.mxu0 0.0
    %96 = vmatpush1.msra.mxu0 0.0
    %97 = vmatprep.subr.mxu0 0.0
    %98 = vmatpush1.msra.mxu0 0.0
    %99 = vmatprep.subr.mxu0 0.0
    %100 = vmatpush1.msra.mxu0 0.0
    %101 = vmatprep.subr.mxu0 0.0
    %102 = vmatpush1.msra.mxu0 0.0
    %103 = vmatprep.subr.mxu0 0.0
    %104 = vmatpush1.msra.mxu0 0.0
    %105 = vmatprep.subr.mxu0 0.0
    %106 = vmatpush1.msra.mxu0 0.0
    %107 = vmatprep.subr.mxu0 0.0
    %108 = vmatpush1.msra.mxu0 0.0
    %109 = vmatprep.subr.mxu0 0.0
    %110 = vmatpush1.msra.mxu0 0.0
    %111 = vmatprep.subr.mxu0 0.0
    %112 = vmatpush1.msra.mxu0 0.0
    %113 = vmatprep.subr.mxu0 0.0
    %114 = vmatpush1.msra.mxu0 0.0
    %115 = vmatprep.subr.mxu0 0.0
    %116 = vmatpush1.msra.mxu0 0.0
    %117 = vmatprep.subr.mxu0 0.0
    %118 = vmatpush1.msra.mxu0 0.0
    %119 = vmatprep.subr.mxu0 0.0
    %120 = vmatpush1.msra.mxu0 0.0
    %121 = vmatprep.subr.mxu0 0.0
    %122 = vmatpush1.msra.mxu0 0.0
    %123 = vmatprep.subr.mxu0 0.0
    %124 = vmatpush1.msra.mxu0 0.0
    %125 = vmatprep.subr.mxu0 0.0
    %126 = vmatpush1.msra.mxu0 0.0
    %127 = vmatprep.subr.mxu0 0.0
    %128 = vmatpush1.msra.mxu0 0.0
    %129 = vmatprep.subr.mxu0 0.0
    %130 = vmatpush1.msra.mxu0 0.0
    %131 = vmatprep.subr.mxu0 0.0
    %132 = vmatpush1.msra.mxu0 0.0
    %133 = vmatprep.subr.mxu0 0.0
    %134 = vmatpush1.msra.mxu0 0.0
    %135 = vmatprep.subr.mxu0 0.0
    %136 = vmatpush1.msra.mxu0 0.0
    %137 = vmatprep.subr.mxu0 0.0
    %138 = vmatpush1.msra.mxu0 0.0
    %139 = vmatprep.subr.mxu0 0.0
    %140 = vmatpush1.msra.mxu0 0.0
    %141 = vmatprep.subr.mxu0 0.0
    %142 = vmatpush1.msra.mxu0 0.0
    %143 = vmatprep.subr.mxu0 0.0
    %144 = vmatpush1.msra.mxu0 0.0
    %145 = vmatprep.subr.mxu0 0.0
    %146 = vmatpush1.msra.mxu0 0.0
    %147 = vmatprep.subr.mxu0 0.0
    %148 = vmatpush1.msra.mxu0 0.0
    %149 = vmatprep.subr.mxu0 0.0
    %150 = vmatpush1.msra.mxu0 0.0
    %151 = vmatprep.mubr.f32.mxu0 0.0
    %152 = vmatmul.mubr.f32.gmra.mrb[0].mxu0 %v85
    %v153 = vpop.f32.mrb[0].mxu0
    %v154 = vadd.f32 %v82, %v153
    %v155 = vpop.f32.mrb[0].mxu0
    %156 = vdwg.mxu0
    %v157 = vmax.f32 %v154, 0.0
    %v158 = vld [vmem:[#allocation6] sm:$0xff]
    %v159 = vld [vmem:[#allocation6 + $0x8] sm:$0xff]
    %v160 = vld [vmem:[#allocation6 + $0x10] sm:$0xff]
    %v161 = vld [vmem:[#allocation6 + $0x18] sm:$0xff]
    %v162 = vld [vmem:[#allocation6 + $0x20] sm:$0xff]
    %v163 = vld [vmem:[#allocation6 + $0x28] sm:$0xff]
    %v164 = vld [vmem:[#allocation6 + $0x30] sm:$0xff]
    %v165 = vld [vmem:[#allocation6 + $0x38] sm:$0xff]
    %v166 = vld [vmem:[#allocation6 + $0x40] sm:$0xff]
    %v167 = vld [vmem:[#allocation6 + $0x48] sm:$0xff]
    %v168 = vld [vmem:[#allocation6 + $0x50] sm:$0xff]
    %v169 = vld [vmem:[#allocation6 + $0x58] sm:$0xff]
    %v170 = vld [vmem:[#allocation6 + $0x60] sm:$0xff]
    %v171 = vld [vmem:[#allocation6 + $0x68] sm:$0xff]
    %v172 = vld [vmem:[#allocation6 + $0x70] sm:$0xff]
    %v173 = vld [vmem:[#allocation6 + $0x78] sm:$0xff]
    %v174 = vld [vmem:[%s4 + $0x1] sm:$0x1]
    %v175 = vlaneseq
    %v176 = vshrl.u32 %v175, 7
    %v177 = vsub.s32 0, %v176
    %v178 = vrot.slane %v174, %v177
    %179 = vmatprep.subr.mxu0 0.0
    %180 = vmatpush1.msra.mxu0 %v158
    %181 = vmatprep.subr.mxu0 0.0
    %182 = vmatpush1.msra.mxu0 %v159
    %183 = vmatprep.subr.mxu0 0.0
    %184 = vmatpush1.msra.mxu0 %v160
    %185 = vmatprep.subr.mxu0 0.0
    %186 = vmatpush1.msra.mxu0 %v161
    %187 = vmatprep.subr.mxu0 0.0
    %188 = vmatpush1.msra.mxu0 %v162
    %189 = vmatprep.subr.mxu0 0.0
    %190 = vmatpush1.msra.mxu0 %v163
    %191 = vmatprep.subr.mxu0 0.0
    %192 = vmatpush1.msra.mxu0 %v164
    %193 = vmatprep.subr.mxu0 0.0
    %194 = vmatpush1.msra.mxu0 %v165
    %195 = vmatprep.subr.mxu0 0.0
    %196 = vmatpush1.msra.mxu0 %v166
    %197 = vmatprep.subr.mxu0 0.0
    %198 = vmatpush1.msra.mxu0 %v167
    %199 = vmatprep.subr.mxu0 0.0
    %200 = vmatpush1.msra.mxu0 %v168
    %201 = vmatprep.subr.mxu0 0.0
    %202 = vmatpush1.msra.mxu0 %v169
    %203 = vmatprep.subr.mxu0 0.0
    %204 = vmatpush1.msra.mxu0 %v170
    %205 = vmatprep.subr.mxu0 0.0
    %206 = vmatpush1.msra.mxu0 %v171
    %207 = vmatprep.subr.mxu0 0.0
    %208 = vmatpush1.msra.mxu0 %v172
    %209 = vmatprep.subr.mxu0 0.0
    %210 = vmatpush1.msra.mxu0 %v173
    %211 = vmatprep.subr.mxu0 0.0
    %212 = vmatpush1.msra.mxu0 0.0
    %213 = vmatprep.subr.mxu0 0.0
    %214 = vmatpush1.msra.mxu0 0.0
    %215 = vmatprep.subr.mxu0 0.0
    %216 = vmatpush1.msra.mxu0 0.0
    %217 = vmatprep.subr.mxu0 0.0
    %218 = vmatpush1.msra.mxu0 0.0
    %219 = vmatprep.subr.mxu0 0.0
    %220 = vmatpush1.msra.mxu0 0.0
    %221 = vmatprep.subr.mxu0 0.0
    %222 = vmatpush1.msra.mxu0 0.0
    %223 = vmatprep.subr.mxu0 0.0
    %224 = vmatpush1.msra.mxu0 0.0
    %225 = vmatprep.subr.mxu0 0.0
    %226 = vmatpush1.msra.mxu0 0.0
    %227 = vmatprep.subr.mxu0 0.0
    %228 = vmatpush1.msra.mxu0 0.0
    %229 = vmatprep.subr.mxu0 0.0
    %230 = vmatpush1.msra.mxu0 0.0
    %231 = vmatprep.subr.mxu0 0.0
    %232 = vmatpush1.msra.mxu0 0.0
    %233 = vmatprep.subr.mxu0 0.0
    %234 = vmatpush1.msra.mxu0 0.0
    %235 = vmatprep.subr.mxu0 0.0
    %236 = vmatpush1.msra.mxu0 0.0
    %237 = vmatprep.subr.mxu0 0.0
    %238 = vmatpush1.msra.mxu0 0.0
    %239 = vmatprep.subr.mxu0 0.0
    %240 = vmatpush1.msra.mxu0 0.0
    %241 = vmatprep.subr.mxu0 0.0
    %242 = vmatpush1.msra.mxu0 0.0
    %243 = vmatprep.mubr.f32.mxu0 0.0
    %244 = vmatmul.mubr.f32.gmra.mrb[0].mxu0 %v157
    %v245 = vpop.f32.mrb[0].mxu0
    %v246 = vadd.f32 %v178, %v245
    %v247 = vpop.f32.mrb[0].mxu0
    %248 = vdwg.mxu0
    %v249 = vmax.f32 %v246, 0.0
    %v250 = vld [vmem:[#allocation7] sm:$0xff]
    %v251 = vld [vmem:[#allocation7 + $0x8] sm:$0xff]
    %v252 = vld [vmem:[#allocation7 + $0x10] sm:$0xff]
    %v253 = vld [vmem:[#allocation7 + $0x18] sm:$0xff]
    %v254 = vld [vmem:[#allocation7 + $0x20] sm:$0xff]
    %v255 = vld [vmem:[#allocation7 + $0x28] sm:$0xff]
    %v256 = vld [vmem:[#allocation7 + $0x30] sm:$0xff]
    %v257 = vld [vmem:[#allocation7 + $0x38] sm:$0xff]
    %v258 = vld [vmem:[#allocation7 + $0x40] sm:$0xff]
    %v259 = vld [vmem:[#allocation7 + $0x48] sm:$0xff]
    %v260 = vld [vmem:[#allocation7 + $0x50] sm:$0xff]
    %v261 = vld [vmem:[#allocation7 + $0x58] sm:$0xff]
    %v262 = vld [vmem:[#allocation7 + $0x60] sm:$0xff]
    %v263 = vld [vmem:[#allocation7 + $0x68] sm:$0xff]
    %v264 = vld [vmem:[#allocation7 + $0x70] sm:$0xff]
    %v265 = vld [vmem:[#allocation7 + $0x78] sm:$0xff]
    %v266 = vld [vmem:[%s4 + $0x2] sm:$0x1]
    %v267 = vlaneseq
    %v268 = vshrl.u32 %v267, 7
    %v269 = vsub.s32 0, %v268
    %v270 = vrot.slane %v266, %v269
    %271 = vmatprep.subr.mxu0 0.0
    %272 = vmatpush1.msra.mxu0 %v250
    %273 = vmatprep.subr.mxu0 0.0
    %274 = vmatpush1.msra.mxu0 %v251
    %275 = vmatprep.subr.mxu0 0.0
    %276 = vmatpush1.msra.mxu0 %v252
    %277 = vmatprep.subr.mxu0 0.0
    %278 = vmatpush1.msra.mxu0 %v253
    %279 = vmatprep.subr.mxu0 0.0
    %280 = vmatpush1.msra.mxu0 %v254
    %281 = vmatprep.subr.mxu0 0.0
    %282 = vmatpush1.msra.mxu0 %v255
    %283 = vmatprep.subr.mxu0 0.0
    %284 = vmatpush1.msra.mxu0 %v256
    %285 = vmatprep.subr.mxu0 0.0
    %286 = vmatpush1.msra.mxu0 %v257
    %287 = vmatprep.subr.mxu0 0.0
    %288 = vmatpush1.msra.mxu0 %v258
    %289 = vmatprep.subr.mxu0 0.0
    %290 = vmatpush1.msra.mxu0 %v259
    %291 = vmatprep.subr.mxu0 0.0
    %292 = vmatpush1.msra.mxu0 %v260
    %293 = vmatprep.subr.mxu0 0.0
    %294 = vmatpush1.msra.mxu0 %v261
    %295 = vmatprep.subr.mxu0 0.0
    %296 = vmatpush1.msra.mxu0 %v262
    %297 = vmatprep.subr.mxu0 0.0
    %298 = vmatpush1.msra.mxu0 %v263
    %299 = vmatprep.subr.mxu0 0.0
    %300 = vmatpush1.msra.mxu0 %v264
    %301 = vmatprep.subr.mxu0 0.0
    %302 = vmatpush1.msra.mxu0 %v265
    %303 = vmatprep.subr.mxu0 0.0
    %304 = vmatpush1.msra.mxu0 0.0
    %305 = vmatprep.subr.mxu0 0.0
    %306 = vmatpush1.msra.mxu0 0.0
    %307 = vmatprep.subr.mxu0 0.0
    %308 = vmatpush1.msra.mxu0 0.0
    %309 = vmatprep.subr.mxu0 0.0
    %310 = vmatpush1.msra.mxu0 0.0
    %311 = vmatprep.subr.mxu0 0.0
    %312 = vmatpush1.msra.mxu0 0.0
    %313 = vmatprep.subr.mxu0 0.0
    %314 = vmatpush1.msra.mxu0 0.0
    %315 = vmatprep.subr.mxu0 0.0
    %316 = vmatpush1.msra.mxu0 0.0
    %317 = vmatprep.subr.mxu0 0.0
    %318 = vmatpush1.msra.mxu0 0.0
    %319 = vmatprep.subr.mxu0 0.0
    %320 = vmatpush1.msra.mxu0 0.0
    %321 = vmatprep.subr.mxu0 0.0
    %322 = vmatpush1.msra.mxu0 0.0
    %323 = vmatprep.subr.mxu0 0.0
    %324 = vmatpush1.msra.mxu0 0.0
    %325 = vmatprep.subr.mxu0 0.0
    %326 = vmatpush1.msra.mxu0 0.0
    %327 = vmatprep.subr.mxu0 0.0
    %328 = vmatpush1.msra.mxu0 0.0
    %329 = vmatprep.subr.mxu0 0.0
    %330 = vmatpush1.msra.mxu0 0.0
    %331 = vmatprep.subr.mxu0 0.0
    %332 = vmatpush1.msra.mxu0 0.0
    %333 = vmatprep.subr.mxu0 0.0
    %334 = vmatpush1.msra.mxu0 0.0
    %335 = vmatprep.mubr.f32.mxu0 0.0
    %336 = vmatmul.mubr.f32.gmra.mrb[0].mxu0 %v249
    %v337 = vpop.f32.mrb[0].mxu0
    %v338 = vadd.f32 %v270, %v337
    %v339 = vpop.f32.mrb[0].mxu0
    %340 = vdwg.mxu0
    %341 = vst [vmem:[%s5] sm:$0x3] %v338
    // Predicated region
    $region38: #{_forward_impl.1} parent=1 // pred_check
      _
    $region39: #{_forward_impl.1} parent=1 // pred_check_branch
      %343 = sbr.rel (0) target = $region41
    $region40: #{_forward_impl.1} parent=1 // pred_region
      _
    $region41: #{_forward_impl.1} parent=1 // pred_fallthru
      _
    // Predicated region
    $region42: #{_forward_impl.1} parent=1 // pred_check
      _
    $region43: #{_forward_impl.1} parent=1 // pred_check_branch
      %345 = sbr.rel (0) target = $region45
    $region44: #{_forward_impl.1} parent=1 // pred_region
      _
    $region45: #{_forward_impl.1} parent=1 // pred_fallthru
      _
    %346 = vsyncpa [#allocation3], 1
    %347 = vsyncpa [#allocation5], 1
    %348 = vsyncpa [#allocation8], 1

// kernel: _forward_impl.1
$region0: #{_forward_impl.1}
  #allocation0 [shape = 'u32[]', space=smem, size = 0x4, offset = 0x4, fixed_abs, tag = 'smem constant byte address 0x4 - core index']
  #allocation1 [shape = 'u32[144,128]{1,0:T(1,128)}', space=vmem, size = 0x12000, scoped, tag = 'internal scratch']
  %s0 = inlined_call_operand.hbm [shape: f32[2,32], index: 0, kind: input, shape index: {}]
  %s1 = inlined_call_operand.hbm [shape: f32[32,128], index: 1, kind: input, shape index: {}]
  %s2 = inlined_call_operand.hbm [shape: f32[128,128], index: 2, kind: input, shape index: {}]
  %s3 = inlined_call_operand.hbm [shape: f32[128,128], index: 3, kind: input, shape index: {}]
  %s4 = inlined_call_operand.vmem [shape: f32[3,128], index: 4, kind: input, shape index: {}]
  %s5 = inlined_call_operand.vmem [shape: f32[2,128], index: 5, kind: output, shape index: {}]
  %s6 = sld [smem:[#allocation0]]
  $region46: #{_forward_impl.1} parent=0
    _
  %s8 = ssub.s32 1, %s6
  %s9 = scalar_select 0, %s8, %s6
  $region1: #{_forward_impl.1} parent=0
    #allocation2 [shape = 'u8[1024]{0}', space=vmem, size = 0x400, scoped, tag = 'input window, operand 0, single buffered']
    #allocation3 [shape = 's32[1]{0}', space=sflag, size = 0x4, scoped, tag = 'scoped memory for _forward_impl.1']
    #allocation4 [shape = 'u8[16384]{0}', space=vmem, size = 0x4000, scoped, tag = 'input window, operand 1, single buffered']
    #allocation5 [shape = 's32[1]{0}', space=sflag, size = 0x4, scoped, tag = 'scoped memory for _forward_impl.1']
    #allocation6 [shape = 'u8[65536]{0}', space=vmem, size = 0x10000, scoped, tag = 'input window, operand 2, single buffered']
    #allocation7 [shape = 'u8[65536]{0}', space=vmem, size = 0x10000, scoped, tag = 'input window, operand 3, single buffered']
    #allocation8 [shape = 's32[1]{0}', space=sflag, size = 0x4, scoped, tag = 'scoped memory for _forward_impl.1']
    %10 = vsyncpa [#allocation3], 0
    %11 = vsyncpa [#allocation5], 0
    %12 = vsyncpa [#allocation8], 0
    // Predicated region
    $region2: #{_forward_impl.1} parent=1 // pred_check
      _
    $region3: #{_forward_impl.1} parent=1 // pred_check_branch
      %14 = sbr.rel (0) target = $region5
    $region4: #{_forward_impl.1} parent=1 // pred_region
      %s16 = ssub.s32 32, 32
      %17 = vsyncadd [#allocation3], %s16
      %s19 = sshll.u32 [#allocation2], 4
      %s20 = int_to_ptr.vmem [resolvable:$true] %s19
      %22 = dma.hbm_to_vmem [thread:$0]  %s0, 32, %s20, [#allocation3]
    $region5: #{_forward_impl.1} parent=1 // pred_fallthru
      _
    // Predicated region
    $region6: #{_forward_impl.1} parent=1 // pred_check
      _
    $region7: #{_forward_impl.1} parent=1 // pred_check_branch
      %24 = sbr.rel (0) target = $region9
    $region8: #{_forward_impl.1} parent=1 // pred_region
      %s26 = ssub.s32 512, 512
      %27 = vsyncadd [#allocation5], %s26
      %s28 = sshll.u32 [#allocation4], 4
      %s29 = int_to_ptr.vmem [resolvable:$true] %s28
      %34 = dma.hbm_to_vmem [thread:$0]  %s1, 512, %s29, [#allocation5], 128, 128, 8
    $region9: #{_forward_impl.1} parent=1 // pred_fallthru
      _
    // Predicated region
    $region10: #{_forward_impl.1} parent=1 // pred_check
      _
    $region11: #{_forward_impl.1} parent=1 // pred_check_branch
      %36 = sbr.rel (0) target = $region13
    $region12: #{_forward_impl.1} parent=1 // pred_region
      %s38 = ssub.s32 2048, 2048
      %39 = vsyncadd [#allocation5], %s38
      %s40 = sshll.u32 [#allocation6], 4
      %s41 = int_to_ptr.vmem [resolvable:$true] %s40
      %46 = dma.hbm_to_vmem [thread:$0]  %s2, 2048, %s41, [#allocation5], 128, 128, 8
    $region13: #{_forward_impl.1} parent=1 // pred_fallthru
      _
    // Predicated region
    $region14: #{_forward_impl.1} parent=1 // pred_check
      _
    $region15: #{_forward_impl.1} parent=1 // pred_check_branch
      %48 = sbr.rel (0) target = $region17
    $region16: #{_forward_impl.1} parent=1 // pred_region
      %s50 = ssub.s32 2048, 2048
      %51 = vsyncadd [#allocation8], %s50
      %s52 = sshll.u32 [#allocation7], 4
      %s53 = int_to_ptr.vmem [resolvable:$true] %s52
      %58 = dma.hbm_to_vmem [thread:$0]  %s3, 2048, %s53, [#allocation8], 128, 128, 8
    $region17: #{_forward_impl.1} parent=1 // pred_fallthru
      _
    // Predicated region
    $region18: #{_forward_impl.1} parent=1 // pred_check
      _
    $region19: #{_forward_impl.1} parent=1 // pred_check_branch
      %60 = sbr.rel (0) target = $region21
    $region20: #{_forward_impl.1} parent=1 // pred_region
      _
    $region21: #{_forward_impl.1} parent=1 // pred_fallthru
      _
    // Predicated region
    $region22: #{_forward_impl.1} parent=1 // pred_check
      _
    $region23: #{_forward_impl.1} parent=1 // pred_check_branch
      %62 = sbr.rel (0) target = $region25
    $region24: #{_forward_impl.1} parent=1 // pred_region
      %63 = dma.done [#allocation3], 32
    $region25: #{_forward_impl.1} parent=1 // pred_fallthru
      _
    // Predicated region
    $region26: #{_forward_impl.1} parent=1 // pred_check
      _
    $region27: #{_forward_impl.1} parent=1 // pred_check_branch
      %65 = sbr.rel (0) target = $region29
    $region28: #{_forward_impl.1} parent=1 // pred_region
      %66 = dma.done [#allocation5], 512
    $region29: #{_forward_impl.1} parent=1 // pred_fallthru
      _
    // Predicated region
    $region30: #{_forward_impl.1} parent=1 // pred_check
      _
    $region31: #{_forward_impl.1} parent=1 // pred_check_branch
      %68 = sbr.rel (0) target = $region33
    $region32: #{_forward_impl.1} parent=1 // pred_region
      %69 = dma.done [#allocation5], 2048
    $region33: #{_forward_impl.1} parent=1 // pred_fallthru
      _
    // Predicated region
    $region34: #{_forward_impl.1} parent=1 // pred_check
      _
    $region35: #{_forward_impl.1} parent=1 // pred_check_branch
      %71 = sbr.rel (0) target = $region37
    $region36: #{_forward_impl.1} parent=1 // pred_region
      %72 = dma.done [#allocation8], 2048
    $region37: #{_forward_impl.1} parent=1 // pred_fallthru
      _
    %v73 = vld [vmem:[#allocation2] sm:$0x3]
    %v74 = vld [vmem:[#allocation4] sm:$0xff]
    %v75 = vld [vmem:[#allocation4 + $0x8] sm:$0xff]
    %v76 = vld [vmem:[#allocation4 + $0x10] sm:$0xff]
    %v77 = vld [vmem:[#allocation4 + $0x18] sm:$0xff]
    %v78 = vld [vmem:[%s4] sm:$0x1]
    %v79 = vlaneseq
    %v80 = vshrl.u32 %v79, 7
    %v81 = vsub.s32 0, %v80
    %v82 = vrot.slane %v78, %v81
    %vm83 = vcmask 261120
    %v85 = vsel %vm83, %v73, 0
    %87 = vmatprep.subr.mxu0 0.0
    %88 = vmatpush1.msra.mxu0 %v74
    %89 = vmatprep.subr.mxu0 0.0
    %90 = vmatpush1.msra.mxu0 %v75
    %91 = vmatprep.subr.mxu0 0.0
    %92 = vmatpush1.msra.mxu0 %v76
    %93 = vmatprep.subr.mxu0 0.0
    %94 = vmatpush1.msra.mxu0 %v77
    %95 = vmatprep.subr.mxu0 0.0
    %96 = vmatpush1.msra.mxu0 0.0
    %97 = vmatprep.subr.mxu0 0.0
    %98 = vmatpush1.msra.mxu0 0.0
    %99 = vmatprep.subr.mxu0 0.0
    %100 = vmatpush1.msra.mxu0 0.0
    %101 = vmatprep.subr.mxu0 0.0
    %102 = vmatpush1.msra.mxu0 0.0
    %103 = vmatprep.subr.mxu0 0.0
    %104 = vmatpush1.msra.mxu0 0.0
    %105 = vmatprep.subr.mxu0 0.0
    %106 = vmatpush1.msra.mxu0 0.0
    %107 = vmatprep.subr.mxu0 0.0
    %108 = vmatpush1.msra.mxu0 0.0
    %109 = vmatprep.subr.mxu0 0.0
    %110 = vmatpush1.msra.mxu0 0.0
    %111 = vmatprep.subr.mxu0 0.0
    %112 = vmatpush1.msra.mxu0 0.0
    %113 = vmatprep.subr.mxu0 0.0
    %114 = vmatpush1.msra.mxu0 0.0
    %115 = vmatprep.subr.mxu0 0.0
    %116 = vmatpush1.msra.mxu0 0.0
    %117 = vmatprep.subr.mxu0 0.0
    %118 = vmatpush1.msra.mxu0 0.0
    %119 = vmatprep.subr.mxu0 0.0
    %120 = vmatpush1.msra.mxu0 0.0
    %121 = vmatprep.subr.mxu0 0.0
    %122 = vmatpush1.msra.mxu0 0.0
    %123 = vmatprep.subr.mxu0 0.0
    %124 = vmatpush1.msra.mxu0 0.0
    %125 = vmatprep.subr.mxu0 0.0
    %126 = vmatpush1.msra.mxu0 0.0
    %127 = vmatprep.subr.mxu0 0.0
    %128 = vmatpush1.msra.mxu0 0.0
    %129 = vmatprep.subr.mxu0 0.0
    %130 = vmatpush1.msra.mxu0 0.0
    %131 = vmatprep.subr.mxu0 0.0
    %132 = vmatpush1.msra.mxu0 0.0
    %133 = vmatprep.subr.mxu0 0.0
    %134 = vmatpush1.msra.mxu0 0.0
    %135 = vmatprep.subr.mxu0 0.0
    %136 = vmatpush1.msra.mxu0 0.0
    %137 = vmatprep.subr.mxu0 0.0
    %138 = vmatpush1.msra.mxu0 0.0
    %139 = vmatprep.subr.mxu0 0.0
    %140 = vmatpush1.msra.mxu0 0.0
    %141 = vmatprep.subr.mxu0 0.0
    %142 = vmatpush1.msra.mxu0 0.0
    %143 = vmatprep.subr.mxu0 0.0
    %144 = vmatpush1.msra.mxu0 0.0
    %145 = vmatprep.subr.mxu0 0.0
    %146 = vmatpush1.msra.mxu0 0.0
    %147 = vmatprep.subr.mxu0 0.0
    %148 = vmatpush1.msra.mxu0 0.0
    %149 = vmatprep.subr.mxu0 0.0
    %150 = vmatpush1.msra.mxu0 0.0
    %151 = vmatprep.mubr.f32.mxu0 0.0
    %152 = vmatmul.mubr.f32.gmra.mrb[0].mxu0 %v85
    %v153 = vpop.f32.mrb[0].mxu0
    %v154 = vadd.f32 %v82, %v153
    %v155 = vpop.f32.mrb[0].mxu0
    %156 = vdwg.mxu0
    %v157 = vmax.f32 %v154, 0.0
    %v158 = vld [vmem:[#allocation6] sm:$0xff]
    %v159 = vld [vmem:[#allocation6 + $0x8] sm:$0xff]
    %v160 = vld [vmem:[#allocation6 + $0x10] sm:$0xff]
    %v161 = vld [vmem:[#allocation6 + $0x18] sm:$0xff]
    %v162 = vld [vmem:[#allocation6 + $0x20] sm:$0xff]
    %v163 = vld [vmem:[#allocation6 + $0x28] sm:$0xff]
    %v164 = vld [vmem:[#allocation6 + $0x30] sm:$0xff]
    %v165 = vld [vmem:[#allocation6 + $0x38] sm:$0xff]
    %v166 = vld [vmem:[#allocation6 + $0x40] sm:$0xff]
    %v167 = vld [vmem:[#allocation6 + $0x48] sm:$0xff]
    %v168 = vld [vmem:[#allocation6 + $0x50] sm:$0xff]
    %v169 = vld [vmem:[#allocation6 + $0x58] sm:$0xff]
    %v170 = vld [vmem:[#allocation6 + $0x60] sm:$0xff]
    %v171 = vld [vmem:[#allocation6 + $0x68] sm:$0xff]
    %v172 = vld [vmem:[#allocation6 + $0x70] sm:$0xff]
    %v173 = vld [vmem:[#allocation6 + $0x78] sm:$0xff]
    %v174 = vld [vmem:[%s4 + $0x1] sm:$0x1]
    %v175 = vlaneseq
    %v176 = vshrl.u32 %v175, 7
    %v177 = vsub.s32 0, %v176
    %v178 = vrot.slane %v174, %v177
    %179 = vmatprep.subr.mxu0 0.0
    %180 = vmatpush1.msra.mxu0 %v158
    %181 = vmatprep.subr.mxu0 0.0
    %182 = vmatpush1.msra.mxu0 %v159
    %183 = vmatprep.subr.mxu0 0.0
    %184 = vmatpush1.msra.mxu0 %v160
    %185 = vmatprep.subr.mxu0 0.0
    %186 = vmatpush1.msra.mxu0 %v161
    %187 = vmatprep.subr.mxu0 0.0
    %188 = vmatpush1.msra.mxu0 %v162
    %189 = vmatprep.subr.mxu0 0.0
    %190 = vmatpush1.msra.mxu0 %v163
    %191 = vmatprep.subr.mxu0 0.0
    %192 = vmatpush1.msra.mxu0 %v164
    %193 = vmatprep.subr.mxu0 0.0
    %194 = vmatpush1.msra.mxu0 %v165
    %195 = vmatprep.subr.mxu0 0.0
    %196 = vmatpush1.msra.mxu0 %v166
    %197 = vmatprep.subr.mxu0 0.0
    %198 = vmatpush1.msra.mxu0 %v167
    %199 = vmatprep.subr.mxu0 0.0
    %200 = vmatpush1.msra.mxu0 %v168
    %201 = vmatprep.subr.mxu0 0.0
    %202 = vmatpush1.msra.mxu0 %v169
    %203 = vmatprep.subr.mxu0 0.0
    %204 = vmatpush1.msra.mxu0 %v170
    %205 = vmatprep.subr.mxu0 0.0
    %206 = vmatpush1.msra.mxu0 %v171
    %207 = vmatprep.subr.mxu0 0.0
    %208 = vmatpush1.msra.mxu0 %v172
    %209 = vmatprep.subr.mxu0 0.0
    %210 = vmatpush1.msra.mxu0 %v173
    %211 = vmatprep.subr.mxu0 0.0
    %212 = vmatpush1.msra.mxu0 0.0
    %213 = vmatprep.subr.mxu0 0.0
    %214 = vmatpush1.msra.mxu0 0.0
    %215 = vmatprep.subr.mxu0 0.0
    %216 = vmatpush1.msra.mxu0 0.0
    %217 = vmatprep.subr.mxu0 0.0
    %218 = vmatpush1.msra.mxu0 0.0
    %219 = vmatprep.subr.mxu0 0.0
    %220 = vmatpush1.msra.mxu0 0.0
    %221 = vmatprep.subr.mxu0 0.0
    %222 = vmatpush1.msra.mxu0 0.0
    %223 = vmatprep.subr.mxu0 0.0
    %224 = vmatpush1.msra.mxu0 0.0
    %225 = vmatprep.subr.mxu0 0.0
    %226 = vmatpush1.msra.mxu0 0.0
    %227 = vmatprep.subr.mxu0 0.0
    %228 = vmatpush1.msra.mxu0 0.0
    %229 = vmatprep.subr.mxu0 0.0
    %230 = vmatpush1.msra.mxu0 0.0
    %231 = vmatprep.subr.mxu0 0.0
    %232 = vmatpush1.msra.mxu0 0.0
    %233 = vmatprep.subr.mxu0 0.0
    %234 = vmatpush1.msra.mxu0 0.0
    %235 = vmatprep.subr.mxu0 0.0
    %236 = vmatpush1.msra.mxu0 0.0
    %237 = vmatprep.subr.mxu0 0.0
    %238 = vmatpush1.msra.mxu0 0.0
    %239 = vmatprep.subr.mxu0 0.0
    %240 = vmatpush1.msra.mxu0 0.0
    %241 = vmatprep.subr.mxu0 0.0
    %242 = vmatpush1.msra.mxu0 0.0
    %243 = vmatprep.mubr.f32.mxu0 0.0
    %244 = vmatmul.mubr.f32.gmra.mrb[0].mxu0 %v157
    %v245 = vpop.f32.mrb[0].mxu0
    %v246 = vadd.f32 %v178, %v245
    %v247 = vpop.f32.mrb[0].mxu0
    %248 = vdwg.mxu0
    %v249 = vmax.f32 %v246, 0.0
    %v250 = vld [vmem:[#allocation7] sm:$0xff]
    %v251 = vld [vmem:[#allocation7 + $0x8] sm:$0xff]
    %v252 = vld [vmem:[#allocation7 + $0x10] sm:$0xff]
    %v253 = vld [vmem:[#allocation7 + $0x18] sm:$0xff]
    %v254 = vld [vmem:[#allocation7 + $0x20] sm:$0xff]
    %v255 = vld [vmem:[#allocation7 + $0x28] sm:$0xff]
    %v256 = vld [vmem:[#allocation7 + $0x30] sm:$0xff]
    %v257 = vld [vmem:[#allocation7 + $0x38] sm:$0xff]
    %v258 = vld [vmem:[#allocation7 + $0x40] sm:$0xff]
    %v259 = vld [vmem:[#allocation7 + $0x48] sm:$0xff]
    %v260 = vld [vmem:[#allocation7 + $0x50] sm:$0xff]
    %v261 = vld [vmem:[#allocation7 + $0x58] sm:$0xff]
    %v262 = vld [vmem:[#allocation7 + $0x60] sm:$0xff]
    %v263 = vld [vmem:[#allocation7 + $0x68] sm:$0xff]
    %v264 = vld [vmem:[#allocation7 + $0x70] sm:$0xff]
    %v265 = vld [vmem:[#allocation7 + $0x78] sm:$0xff]
    %v266 = vld [vmem:[%s4 + $0x2] sm:$0x1]
    %v267 = vlaneseq
    %v268 = vshrl.u32 %v267, 7
    %v269 = vsub.s32 0, %v268
    %v270 = vrot.slane %v266, %v269
    %271 = vmatprep.subr.mxu0 0.0
    %272 = vmatpush1.msra.mxu0 %v250
    %273 = vmatprep.subr.mxu0 0.0
    %274 = vmatpush1.msra.mxu0 %v251
    %275 = vmatprep.subr.mxu0 0.0
    %276 = vmatpush1.msra.mxu0 %v252
    %277 = vmatprep.subr.mxu0 0.0
    %278 = vmatpush1.msra.mxu0 %v253
    %279 = vmatprep.subr.mxu0 0.0
    %280 = vmatpush1.msra.mxu0 %v254
    %281 = vmatprep.subr.mxu0 0.0
    %282 = vmatpush1.msra.mxu0 %v255
    %283 = vmatprep.subr.mxu0 0.0
    %284 = vmatpush1.msra.mxu0 %v256
    %285 = vmatprep.subr.mxu0 0.0
    %286 = vmatpush1.msra.mxu0 %v257
    %287 = vmatprep.subr.mxu0 0.0
    %288 = vmatpush1.msra.mxu0 %v258
    %289 = vmatprep.subr.mxu0 0.0
    %290 = vmatpush1.msra.mxu0 %v259
    %291 = vmatprep.subr.mxu0 0.0
    %292 = vmatpush1.msra.mxu0 %v260
    %293 = vmatprep.subr.mxu0 0.0
    %294 = vmatpush1.msra.mxu0 %v261
    %295 = vmatprep.subr.mxu0 0.0
    %296 = vmatpush1.msra.mxu0 %v262
    %297 = vmatprep.subr.mxu0 0.0
    %298 = vmatpush1.msra.mxu0 %v263
    %299 = vmatprep.subr.mxu0 0.0
    %300 = vmatpush1.msra.mxu0 %v264
    %301 = vmatprep.subr.mxu0 0.0
    %302 = vmatpush1.msra.mxu0 %v265
    %303 = vmatprep.subr.mxu0 0.0
    %304 = vmatpush1.msra.mxu0 0.0
    %305 = vmatprep.subr.mxu0 0.0
    %306 = vmatpush1.msra.mxu0 0.0
    %307 = vmatprep.subr.mxu0 0.0
    %308 = vmatpush1.msra.mxu0 0.0
    %309 = vmatprep.subr.mxu0 0.0
    %310 = vmatpush1.msra.mxu0 0.0
    %311 = vmatprep.subr.mxu0 0.0
    %312 = vmatpush1.msra.mxu0 0.0
    %313 = vmatprep.subr.mxu0 0.0
    %314 = vmatpush1.msra.mxu0 0.0
    %315 = vmatprep.subr.mxu0 0.0
    %316 = vmatpush1.msra.mxu0 0.0
    %317 = vmatprep.subr.mxu0 0.0
    %318 = vmatpush1.msra.mxu0 0.0
    %319 = vmatprep.subr.mxu0 0.0
    %320 = vmatpush1.msra.mxu0 0.0
    %321 = vmatprep.subr.mxu0 0.0
    %322 = vmatpush1.msra.mxu0 0.0
    %323 = vmatprep.subr.mxu0 0.0
    %324 = vmatpush1.msra.mxu0 0.0
    %325 = vmatprep.subr.mxu0 0.0
    %326 = vmatpush1.msra.mxu0 0.0
    %327 = vmatprep.subr.mxu0 0.0
    %328 = vmatpush1.msra.mxu0 0.0
    %329 = vmatprep.subr.mxu0 0.0
    %330 = vmatpush1.msra.mxu0 0.0
    %331 = vmatprep.subr.mxu0 0.0
    %332 = vmatpush1.msra.mxu0 0.0
    %333 = vmatprep.subr.mxu0 0.0
    %334 = vmatpush1.msra.mxu0 0.0
    %335 = vmatprep.mubr.f32.mxu0 0.0
    %336 = vmatmul.mubr.f32.gmra.mrb[0].mxu0 %v249
    %v337 = vpop.f32.mrb[0].mxu0
    %v338 = vadd.f32 %v270, %v337
    %v339 = vpop.f32.mrb[0].mxu0
    %340 = vdwg.mxu0
    %341 = vst [vmem:[%s5] sm:$0x3] %v338
    // Predicated region
    $region38: #{_forward_impl.1} parent=1 // pred_check
      _
    $region39: #{_forward_impl.1} parent=1 // pred_check_branch
      %343 = sbr.rel (0) target = $region41
    $region40: #{_forward_impl.1} parent=1 // pred_region
      _
    $region41: #{_forward_impl.1} parent=1 // pred_fallthru
      _
    // Predicated region
    $region42: #{_forward_impl.1} parent=1 // pred_check
      _
    $region43: #{_forward_impl.1} parent=1 // pred_check_branch
      %345 = sbr.rel (0) target = $region45
    $region44: #{_forward_impl.1} parent=1 // pred_region
      _
    $region45: #{_forward_impl.1} parent=1 // pred_fallthru
      _
    %346 = vsyncpa [#allocation3], 1
    %347 = vsyncpa [#allocation5], 1
    %348 = vsyncpa [#allocation8], 1

</llo_original>
